<compile_context>
chip_gen: v7x
topology: tpu7x:2x2x1
jax: 0.10.0
libtpu: 0.0.40
codegen_flags: <defaults>
</compile_context>

<pallas_src>
import numpy as np
import jax
import jax.numpy as jnp
from jax import lax
from jax.experimental import pallas as pl
from jax.experimental.pallas import tpu as pltpu


def mlp_layer_sizes(input_size: int, output_size: int):
    """Replicates the layer-size construction logic of the PyTorch MLP.__init__."""
    hidden_size = int(np.power(2, int(np.log2(input_size))))
    if hidden_size < output_size:
        sizes = [input_size, hidden_size, output_size]
    else:
        hidden_layer = [input_size, hidden_size]
        while hidden_size > output_size * 2:
            hidden_size = hidden_size // 2
            hidden_layer.append(hidden_size)
        hidden_layer.append(output_size)
        sizes = hidden_layer
    # In both branches the trailing ReLU is absent (modules[:-1] / explicit).
    relu_after_last = False
    return sizes, relu_after_last


def make_mlp_kernel(n_layers, relu_after_last, valid_rows, tile, ragged):
    """Kernel body. Ref order: x_ref, w1, b1, ..., wN, bN, out_ref."""

    def kernel(*refs):
        x_ref = refs[0]
        o_ref = refs[-1]
        params = refs[1:-1]

        h = x_ref[...]
        for layer in range(n_layers):
            w = params[2 * layer][...]
            b = params[2 * layer + 1][...]
            # MXU matmul in the weight dtype (bf16-native), f32 accumulation.
            # If x is f32 and w is bf16 the LHS is quantized to bf16 here.
            acc = jnp.dot(h.astype(w.dtype), w, preferred_element_type=jnp.float32)
            acc = acc + b.astype(jnp.float32)
            is_last = layer == n_layers - 1
            if (not is_last) or relu_after_last:
                acc = jnp.maximum(acc, 0.0)
            h = acc if is_last else acc.astype(w.dtype)

        if ragged:
            # Zero the out-of-range rows of the (clipped) last block so no
            # garbage (potential NaN/Inf from uninitialized VMEM) is stored.
            row0 = pl.program_id(0) * tile
            rows = row0 + lax.broadcasted_iota(jnp.int32, h.shape, 0)
            h = jnp.where(rows < valid_rows, h, jnp.zeros_like(h))

        o_ref[...] = h.astype(o_ref.dtype)

    return kernel


def _round_up(x, m):
    return ((x + m - 1) // m) * m


def mlp_forward(x, weights, biases, relu_after_last=False, *,
                target_step_bytes=4 << 20, min_step_bytes=1 << 20,
                max_tile_rows=8192):
    """x: (B, input_size); weights[i]: (in_i, out_i); biases[i]: (1, out_i)."""
    B, in_size = x.shape
    n_layers = len(weights)
    out_size = weights[-1].shape[1]
    out_dtype = x.dtype

    # ---- (1) Batch-fold: view `fold` consecutive rows as one lane-dense row
    # and make the weights block-diagonal.  Both reshapes (input & output) are
    # free (contiguous row-major); the kernel body is unchanged.
    fold = 1
    for f in (4, 2):
        if in_size * f <= 128 and B % f == 0:
            fold = f
            break
    if fold > 1:
        x = x.reshape(B // fold, fold * in_size)                  # free
        weights = [jnp.kron(jnp.eye(fold, dtype=w.dtype), w) for w in weights]
        biases = [jnp.tile(b, (1, fold)) for b in biases]

    Bf, in_f = x.shape
    out_f = out_size * fold

    # ---- (2) Tiling: size each grid step to move ~target_step_bytes so the
    # per-step pipeline overhead is negligible.  Small batches -> one block.
    # Large batches -> >= 2 steps so "parallel" can shard across v7x's 2 TCs.
    # No padding: ragged tails use a cdiv grid + masked last-block store.
    bytes_per_row = in_f * x.dtype.itemsize + out_f * jnp.dtype(out_dtype).itemsize
    total_bytes = Bf * bytes_per_row
    if Bf <= 16 or total_bytes <= 2 * min_step_bytes:
        tile = Bf
        grid_n = 1
    else:
        tile = int(target_step_bytes // max(bytes_per_row, 1))
        tile = min(tile, max_tile_rows, _round_up(pl.cdiv(Bf, 2), 8))
        tile = max(8, (tile // 8) * 8)
        grid_n = pl.cdiv(Bf, tile)
    ragged = (grid_n * tile) != Bf

    kernel = make_mlp_kernel(n_layers, relu_after_last, Bf, tile, ragged)

    # x / out tiled over the (folded) batch; weights & biases whole-array
    # VMEM residents (constant block index -> fetched once).
    in_specs = [pl.BlockSpec((tile, in_f), lambda i: (i, 0))]
    for w, b in zip(weights, biases):
        in_specs.append(pl.BlockSpec(w.shape, lambda i: (0, 0)))
        in_specs.append(pl.BlockSpec(b.shape, lambda i: (0, 0)))
    out_spec = pl.BlockSpec((tile, out_f), lambda i: (i, 0))

    flat_params = []
    for w, b in zip(weights, biases):
        flat_params.extend([w, b])

    flops = 2 * Bf * sum(int(w.shape[0]) * int(w.shape[1]) for w in weights)
    bytes_accessed = int(
        Bf * in_f * x.dtype.itemsize
        + Bf * out_f * jnp.dtype(out_dtype).itemsize
        + sum(int(w.size) * w.dtype.itemsize for w in weights)
        + sum(int(b.size) * b.dtype.itemsize for b in biases))
    cost = pl.CostEstimate(flops=flops, transcendentals=0,
                           bytes_accessed=bytes_accessed)

    out = pl.pallas_call(
        kernel,
        out_shape=jax.ShapeDtypeStruct((Bf, out_f), out_dtype),
        grid=(grid_n,),
        in_specs=in_specs,
        out_specs=out_spec,
        compiler_params=pltpu.CompilerParams(
            dimension_semantics=("parallel",),   # batch axis shards across TCs (v7x)
            vmem_limit_bytes=32 * 1024 * 1024,
        ),
        cost_estimate=cost,
    )(x, *flat_params)

    if fold > 1:
        out = out.reshape(B, out_size)                            # free
    return out


def init_params(sizes, key, dtype=jnp.float32):
    """Deterministic synthetic init (PyTorch-Linear-like uniform bounds)."""
    weights, biases = [], []
    for i in range(len(sizes) - 1):
        fan_in, fan_out = sizes[i], sizes[i + 1]
        key, wk, bk = jax.random.split(key, 3)
        bound = 1.0 / np.sqrt(fan_in)
        weights.append(jax.random.uniform(wk, (fan_in, fan_out), dtype, -bound, bound))
        biases.append(jax.random.uniform(bk, (1, fan_out), dtype, -bound, bound))
    return weights, biases


def mlp_reference(x, weights, biases, relu_after_last=False):
    h = x
    n = len(weights)
    for i, (w, b) in enumerate(zip(weights, biases)):
        h = h @ w + b
        if i < n - 1 or relu_after_last:
            h = jnp.maximum(h, 0.0)
    return h


if __name__ == "__main__":
    # Module config: MLP(input_size=32, output_size=8)
    #   -> hidden_layer = [32, 32, 16, 8]
    #   -> Linear(32,32) ReLU Linear(32,16) ReLU Linear(16,8)
    input_size, output_size = 32, 8
    sizes, relu_after_last = mlp_layer_sizes(input_size, output_size)

    key = jax.random.PRNGKey(0)
    key, pk = jax.random.split(key)
    weights, biases = init_params(sizes, pk, dtype=jnp.float32)

    # 1) Small f32 batch: fold=4, single-block fast path (grid=(1,)).
    key, xk = jax.random.split(key)
    x1 = jax.random.normal(xk, (16, input_size), dtype=jnp.float32)
    out1 = jax.block_until_ready(mlp_forward(x1, weights, biases, relu_after_last))
    ref1 = mlp_reference(x1, weights, biases, relu_after_last)
    assert out1.shape == (16, output_size)
    np.testing.assert_allclose(np.asarray(out1), np.asarray(ref1), rtol=1e-4, atol=1e-4)

    # 2) Ragged multi-step grid (forced with small step targets): fold=4,
    #    grid>1, masked partial last block, no padding/slicing copies.
    key, xk = jax.random.split(key)
    x2 = jax.random.normal(xk, (4000, input_size), dtype=jnp.float32)
    out2 = jax.block_until_ready(
        mlp_forward(x2, weights, biases, relu_after_last,
                    target_step_bytes=64 << 10, min_step_bytes=32 << 10))
    ref2 = mlp_reference(x2, weights, biases, relu_after_last)
    assert out2.shape == (4000, output_size)
    np.testing.assert_allclose(np.asarray(out2), np.asarray(ref2), rtol=1e-4, atol=1e-4)

    # 3) Batch not divisible by the fold -> fold=1 fallback, ragged grid.
    key, xk = jax.random.split(key)
    x3 = jax.random.normal(xk, (1003, input_size), dtype=jnp.float32)
    out3 = jax.block_until_ready(
        mlp_forward(x3, weights, biases, relu_after_last,
                    target_step_bytes=64 << 10, min_step_bytes=32 << 10))
    ref3 = mlp_reference(x3, weights, biases, relu_after_last)
    assert out3.shape == (1003, output_size)
    np.testing.assert_allclose(np.asarray(out3), np.asarray(ref3), rtol=1e-4, atol=1e-4)

    # 4) bf16 weights/activations, f32 MXU accumulation (loose tolerance).
    key, xk = jax.random.split(key)
    x4 = jax.random.normal(xk, (1000, input_size)).astype(jnp.bfloat16)
    w_bf16 = [w.astype(jnp.bfloat16) for w in weights]
    b_bf16 = [b.astype(jnp.bfloat16) for b in biases]
    out4 = jax.block_until_ready(mlp_forward(x4, w_bf16, b_bf16, relu_after_last))
    ref4 = mlp_reference(x4.astype(jnp.float32),
                         [w.astype(jnp.float32) for w in w_bf16],
                         [b.astype(jnp.float32) for b in b_bf16],
                         relu_after_last)
    assert out4.shape == (1000, output_size)
    np.testing.assert_allclose(np.asarray(out4, dtype=np.float32), np.asarray(ref4),
                               rtol=5e-2, atol=5e-2)

    print("KERNEL_OK")
</pallas_src>

<mosaic_0001>
module attributes {stable_mosaic.version = 11 : i64} {
  func.func @kernel(%arg0: i32, %arg1: memref<4x128xf32, #tpu.memory_space<vmem>>, %arg2: memref<128x128xf32, #tpu.memory_space<vmem>>, %arg3: memref<1x128xf32, #tpu.memory_space<vmem>>, %arg4: memref<128x64xf32, #tpu.memory_space<vmem>>, %arg5: memref<1x64xf32, #tpu.memory_space<vmem>>, %arg6: memref<64x32xf32, #tpu.memory_space<vmem>>, %arg7: memref<1x32xf32, #tpu.memory_space<vmem>>, %arg8: memref<4x32xf32, #tpu.memory_space<vmem>>) attributes {dimension_semantics = [#tpu.dimension_semantics<parallel>], iteration_bounds = array<i64: 1>, scalar_prefetch = 0 : i64, scratch_operands = 0 : i64, tpu.core_type = #tpu.core_type<tc>, window_params = [{transform_indices = @transform_0, window_bounds = array<i64: 4, 128>}, {pipeline_mode = #tpu.pipeline_mode<synchronous>, transform_indices = @transform_1, window_bounds = array<i64: 128, 128>}, {pipeline_mode = #tpu.pipeline_mode<synchronous>, transform_indices = @transform_2, window_bounds = array<i64: 1, 128>}, {pipeline_mode = #tpu.pipeline_mode<synchronous>, transform_indices = @transform_3, window_bounds = array<i64: 128, 64>}, {pipeline_mode = #tpu.pipeline_mode<synchronous>, transform_indices = @transform_4, window_bounds = array<i64: 1, 64>}, {pipeline_mode = #tpu.pipeline_mode<synchronous>, transform_indices = @transform_5, window_bounds = array<i64: 64, 32>}, {pipeline_mode = #tpu.pipeline_mode<synchronous>, transform_indices = @transform_6, window_bounds = array<i64: 1, 32>}, {transform_indices = @transform_7, window_bounds = array<i64: 4, 32>}]} {
    %c0 = arith.constant 0 : index
    %c0_0 = arith.constant 0 : index
    %0 = vector.load %arg1[%c0, %c0_0] : memref<4x128xf32, #tpu.memory_space<vmem>>, vector<4x128xf32>
    %c0_1 = arith.constant 0 : index
    %c0_2 = arith.constant 0 : index
    %1 = vector.load %arg2[%c0_1, %c0_2] : memref<128x128xf32, #tpu.memory_space<vmem>>, vector<128x128xf32>
    %c0_3 = arith.constant 0 : index
    %c0_4 = arith.constant 0 : index
    %2 = vector.load %arg3[%c0_3, %c0_4] : memref<1x128xf32, #tpu.memory_space<vmem>>, vector<1x128xf32>
    %cst = arith.constant dense<0.000000e+00> : vector<4x128xf32>
    %3 = tpu.matmul %0, %1, %cst {dimension_numbers = #tpu.dot_dimension_numbers<[1], [0], [0], [1], [0, 0, 1, 1], [], []>} : vector<4x128xf32>, vector<128x128xf32>, vector<4x128xf32> -> vector<4x128xf32>
    %4 = vector.broadcast %2 : vector<1x128xf32> to vector<4x128xf32>
    %5 = arith.addf %3, %4 : vector<4x128xf32>
    %cst_5 = arith.constant 0.000000e+00 : f32
    %6 = vector.broadcast %cst_5 : f32 to vector<4x128xf32>
    %7 = arith.maximumf %5, %6 : vector<4x128xf32>
    %c0_6 = arith.constant 0 : index
    %c0_7 = arith.constant 0 : index
    %8 = vector.load %arg4[%c0_6, %c0_7] : memref<128x64xf32, #tpu.memory_space<vmem>>, vector<128x64xf32>
    %c0_8 = arith.constant 0 : index
    %c0_9 = arith.constant 0 : index
    %9 = vector.load %arg5[%c0_8, %c0_9] : memref<1x64xf32, #tpu.memory_space<vmem>>, vector<1x64xf32>
    %cst_10 = arith.constant dense<0.000000e+00> : vector<4x64xf32>
    %10 = tpu.matmul %7, %8, %cst_10 {dimension_numbers = #tpu.dot_dimension_numbers<[1], [0], [0], [1], [0, 0, 1, 1], [], []>} : vector<4x128xf32>, vector<128x64xf32>, vector<4x64xf32> -> vector<4x64xf32>
    %11 = vector.broadcast %9 : vector<1x64xf32> to vector<4x64xf32>
    %12 = arith.addf %10, %11 : vector<4x64xf32>
    %cst_11 = arith.constant 0.000000e+00 : f32
    %13 = vector.broadcast %cst_11 : f32 to vector<4x64xf32>
    %14 = arith.maximumf %12, %13 : vector<4x64xf32>
    %c0_12 = arith.constant 0 : index
    %c0_13 = arith.constant 0 : index
    %15 = vector.load %arg6[%c0_12, %c0_13] : memref<64x32xf32, #tpu.memory_space<vmem>>, vector<64x32xf32>
    %c0_14 = arith.constant 0 : index
    %c0_15 = arith.constant 0 : index
    %16 = vector.load %arg7[%c0_14, %c0_15] : memref<1x32xf32, #tpu.memory_space<vmem>>, vector<1x32xf32>
    %cst_16 = arith.constant dense<0.000000e+00> : vector<4x32xf32>
    %17 = tpu.matmul %14, %15, %cst_16 {dimension_numbers = #tpu.dot_dimension_numbers<[1], [0], [0], [1], [0, 0, 1, 1], [], []>} : vector<4x64xf32>, vector<64x32xf32>, vector<4x32xf32> -> vector<4x32xf32>
    %18 = vector.broadcast %16 : vector<1x32xf32> to vector<4x32xf32>
    %19 = arith.addf %17, %18 : vector<4x32xf32>
    %c0_17 = arith.constant 0 : index
    %c0_18 = arith.constant 0 : index
    %20 = vector.load %arg8[%c0_17, %c0_18] : memref<4x32xf32, #tpu.memory_space<vmem>>, vector<4x32xf32>
    tpu.vector_store %arg8[%c0_17, %c0_18], %19 {strides = array<i32>} : memref<4x32xf32, #tpu.memory_space<vmem>>, vector<4x32xf32>,
    return
  }
  func.func @transform_0(%arg0: i32) -> (i32, i32) {
    %c0_i32 = arith.constant 0 : i32
    %c0_i32_0 = arith.constant 0 : i32
    return %arg0, %c0_i32 : i32, i32
  }
  func.func @transform_1(%arg0: i32) -> (i32, i32) {
    %c0_i32 = arith.constant 0 : i32
    %c0_i32_0 = arith.constant 0 : i32
    %c0_i32_1 = arith.constant 0 : i32
    return %c0_i32, %c0_i32_0 : i32, i32
  }
  func.func @transform_2(%arg0: i32) -> (i32, i32) {
    %c0_i32 = arith.constant 0 : i32
    %c0_i32_0 = arith.constant 0 : i32
    %c0_i32_1 = arith.constant 0 : i32
    return %c0_i32, %c0_i32_0 : i32, i32
  }
  func.func @transform_3(%arg0: i32) -> (i32, i32) {
    %c0_i32 = arith.constant 0 : i32
    %c0_i32_0 = arith.constant 0 : i32
    %c0_i32_1 = arith.constant 0 : i32
    return %c0_i32, %c0_i32_0 : i32, i32
  }
  func.func @transform_4(%arg0: i32) -> (i32, i32) {
    %c0_i32 = arith.constant 0 : i32
    %c0_i32_0 = arith.constant 0 : i32
    %c0_i32_1 = arith.constant 0 : i32
    return %c0_i32, %c0_i32_0 : i32, i32
  }
  func.func @transform_5(%arg0: i32) -> (i32, i32) {
    %c0_i32 = arith.constant 0 : i32
    %c0_i32_0 = arith.constant 0 : i32
    %c0_i32_1 = arith.constant 0 : i32
    return %c0_i32, %c0_i32_0 : i32, i32
  }
  func.func @transform_6(%arg0: i32) -> (i32, i32) {
    %c0_i32 = arith.constant 0 : i32
    %c0_i32_0 = arith.constant 0 : i32
    %c0_i32_1 = arith.constant 0 : i32
    return %c0_i32, %c0_i32_0 : i32, i32
  }
  func.func @transform_7(%arg0: i32) -> (i32, i32) {
    %c0_i32 = arith.constant 0 : i32
    %c0_i32_0 = arith.constant 0 : i32
    return %arg0, %c0_i32 : i32, i32
  }
}

</mosaic_0001>

<llo_original>
// kernel: tpu_custom_call.1
$region0: #{tpu_custom_call.1}
  #allocation0 [shape = 'u32[]', space=smem, size = 0x4, offset = 0x4, fixed_abs, tag = 'smem constant byte address 0x4 - core index']
  #allocation1 [shape = 'u32[144,128]{1,0:T(1,128)}', space=vmem, size = 0x12000, scoped, tag = 'internal scratch']
  %s0 = inlined_call_operand.vmem [shape: f32[4,128], index: 0, kind: input, shape index: {}]
  %s1 = inlined_call_operand.vmem [shape: f32[128,128], index: 1, kind: input, shape index: {}]
  %s2 = inlined_call_operand.vmem [shape: f32[1,128], index: 2, kind: input, shape index: {}]
  %s3 = inlined_call_operand.vmem [shape: f32[128,64], index: 3, kind: input, shape index: {}]
  %s4 = inlined_call_operand.vmem [shape: f32[1,64], index: 4, kind: input, shape index: {}]
  %s5 = inlined_call_operand.vmem [shape: f32[64,32], index: 5, kind: input, shape index: {}]
  %s6 = inlined_call_operand.vmem [shape: f32[1,32], index: 6, kind: input, shape index: {}]
  %s7 = inlined_call_operand.hbm [shape: f32[4,32], index: 7, kind: output, shape index: {}]
  %s8 = sld [smem:[#allocation0]]
  $region38: #{tpu_custom_call.1} parent=0
    _
  %s10 = ssub.s32 1, %s8
  %s11 = scalar_select 0, %s10, %s8
  $region1: #{tpu_custom_call.1} parent=0
    #allocation2 [shape = 'u8[2048]{0}', space=vmem, size = 0x800, scoped, tag = 'output window, operand 0, single buffered']
    #allocation3 [shape = 's32[1]{0}', space=sflag, size = 0x4, scoped, tag = 'scoped memory for tpu_custom_call.1']
    %12 = vsyncpa [#allocation3], 0
    // Predicated region
    $region2: #{tpu_custom_call.1} parent=1 // pred_check
      _
    $region3: #{tpu_custom_call.1} parent=1 // pred_check_branch
      %14 = sbr.rel (0) target = $region5
    $region4: #{tpu_custom_call.1} parent=1 // pred_region
      _
    $region5: #{tpu_custom_call.1} parent=1 // pred_fallthru
      _
    // Predicated region
    $region6: #{tpu_custom_call.1} parent=1 // pred_check
      _
    $region7: #{tpu_custom_call.1} parent=1 // pred_check_branch
      %16 = sbr.rel (0) target = $region9
    $region8: #{tpu_custom_call.1} parent=1 // pred_region
      _
    $region9: #{tpu_custom_call.1} parent=1 // pred_fallthru
      _
    // Predicated region
    $region10: #{tpu_custom_call.1} parent=1 // pred_check
      _
    $region11: #{tpu_custom_call.1} parent=1 // pred_check_branch
      %18 = sbr.rel (0) target = $region13
    $region12: #{tpu_custom_call.1} parent=1 // pred_region
      _
    $region13: #{tpu_custom_call.1} parent=1 // pred_fallthru
      _
    // Predicated region
    $region14: #{tpu_custom_call.1} parent=1 // pred_check
      _
    $region15: #{tpu_custom_call.1} parent=1 // pred_check_branch
      %20 = sbr.rel (0) target = $region17
    $region16: #{tpu_custom_call.1} parent=1 // pred_region
      _
    $region17: #{tpu_custom_call.1} parent=1 // pred_fallthru
      _
    // Predicated region
    $region18: #{tpu_custom_call.1} parent=1 // pred_check
      _
    $region19: #{tpu_custom_call.1} parent=1 // pred_check_branch
      %22 = sbr.rel (0) target = $region21
    $region20: #{tpu_custom_call.1} parent=1 // pred_region
      _
    $region21: #{tpu_custom_call.1} parent=1 // pred_fallthru
      _
    // Predicated region
    $region22: #{tpu_custom_call.1} parent=1 // pred_check
      _
    $region23: #{tpu_custom_call.1} parent=1 // pred_check_branch
      %24 = sbr.rel (0) target = $region25
    $region24: #{tpu_custom_call.1} parent=1 // pred_region
      _
    $region25: #{tpu_custom_call.1} parent=1 // pred_fallthru
      _
    // Predicated region
    $region26: #{tpu_custom_call.1} parent=1 // pred_check
      _
    $region27: #{tpu_custom_call.1} parent=1 // pred_check_branch
      %26 = sbr.rel (0) target = $region29
    $region28: #{tpu_custom_call.1} parent=1 // pred_region
      _
    $region29: #{tpu_custom_call.1} parent=1 // pred_fallthru
      _
    %v27 = vld [vmem:[%s0] sm:$0xf]
    %v28 = vld [vmem:[%s1] sm:$0xff]
    %v29 = vld [vmem:[%s1 + $0x8] sm:$0xff]
    %v30 = vld [vmem:[%s1 + $0x10] sm:$0xff]
    %v31 = vld [vmem:[%s1 + $0x18] sm:$0xff]
    %v32 = vld [vmem:[%s1 + $0x20] sm:$0xff]
    %v33 = vld [vmem:[%s1 + $0x28] sm:$0xff]
    %v34 = vld [vmem:[%s1 + $0x30] sm:$0xff]
    %v35 = vld [vmem:[%s1 + $0x38] sm:$0xff]
    %v36 = vld [vmem:[%s1 + $0x40] sm:$0xff]
    %v37 = vld [vmem:[%s1 + $0x48] sm:$0xff]
    %v38 = vld [vmem:[%s1 + $0x50] sm:$0xff]
    %v39 = vld [vmem:[%s1 + $0x58] sm:$0xff]
    %v40 = vld [vmem:[%s1 + $0x60] sm:$0xff]
    %v41 = vld [vmem:[%s1 + $0x68] sm:$0xff]
    %v42 = vld [vmem:[%s1 + $0x70] sm:$0xff]
    %v43 = vld [vmem:[%s1 + $0x78] sm:$0xff]
    %v44 = vld [vmem:[%s2] sm:$0x1]
    %v46 = vlaneseq
    %v47 = vshrl.u32 %v46, 7
    %v48 = vsub.s32 0, %v47
    %v49 = vrot.slane %v44, %v48
    %51 = vmatprep.subr.mxu0 0.0
    %52 = vmatpush1.msra.mxu0 %v28
    %53 = vmatprep.subr.mxu0 0.0
    %54 = vmatpush1.msra.mxu0 %v29
    %55 = vmatprep.subr.mxu0 0.0
    %56 = vmatpush1.msra.mxu0 %v30
    %57 = vmatprep.subr.mxu0 0.0
    %58 = vmatpush1.msra.mxu0 %v31
    %59 = vmatprep.subr.mxu0 0.0
    %60 = vmatpush1.msra.mxu0 %v32
    %61 = vmatprep.subr.mxu0 0.0
    %62 = vmatpush1.msra.mxu0 %v33
    %63 = vmatprep.subr.mxu0 0.0
    %64 = vmatpush1.msra.mxu0 %v34
    %65 = vmatprep.subr.mxu0 0.0
    %66 = vmatpush1.msra.mxu0 %v35
    %67 = vmatprep.subr.mxu0 0.0
    %68 = vmatpush1.msra.mxu0 %v36
    %69 = vmatprep.subr.mxu0 0.0
    %70 = vmatpush1.msra.mxu0 %v37
    %71 = vmatprep.subr.mxu0 0.0
    %72 = vmatpush1.msra.mxu0 %v38
    %73 = vmatprep.subr.mxu0 0.0
    %74 = vmatpush1.msra.mxu0 %v39
    %75 = vmatprep.subr.mxu0 0.0
    %76 = vmatpush1.msra.mxu0 %v40
    %77 = vmatprep.subr.mxu0 0.0
    %78 = vmatpush1.msra.mxu0 %v41
    %79 = vmatprep.subr.mxu0 0.0
    %80 = vmatpush1.msra.mxu0 %v42
    %81 = vmatprep.subr.mxu0 0.0
    %82 = vmatpush1.msra.mxu0 %v43
    %83 = vmatprep.subr.mxu0 0.0
    %84 = vmatpush1.msra.mxu0 0.0
    %85 = vmatprep.subr.mxu0 0.0
    %86 = vmatpush1.msra.mxu0 0.0
    %87 = vmatprep.subr.mxu0 0.0
    %88 = vmatpush1.msra.mxu0 0.0
    %89 = vmatprep.subr.mxu0 0.0
    %90 = vmatpush1.msra.mxu0 0.0
    %91 = vmatprep.subr.mxu0 0.0
    %92 = vmatpush1.msra.mxu0 0.0
    %93 = vmatprep.subr.mxu0 0.0
    %94 = vmatpush1.msra.mxu0 0.0
    %95 = vmatprep.subr.mxu0 0.0
    %96 = vmatpush1.msra.mxu0 0.0
    %97 = vmatprep.subr.mxu0 0.0
    %98 = vmatpush1.msra.mxu0 0.0
    %99 = vmatprep.subr.mxu0 0.0
    %100 = vmatpush1.msra.mxu0 0.0
    %101 = vmatprep.subr.mxu0 0.0
    %102 = vmatpush1.msra.mxu0 0.0
    %103 = vmatprep.subr.mxu0 0.0
    %104 = vmatpush1.msra.mxu0 0.0
    %105 = vmatprep.subr.mxu0 0.0
    %106 = vmatpush1.msra.mxu0 0.0
    %107 = vmatprep.subr.mxu0 0.0
    %108 = vmatpush1.msra.mxu0 0.0
    %109 = vmatprep.subr.mxu0 0.0
    %110 = vmatpush1.msra.mxu0 0.0
    %111 = vmatprep.subr.mxu0 0.0
    %112 = vmatpush1.msra.mxu0 0.0
    %113 = vmatprep.subr.mxu0 0.0
    %114 = vmatpush1.msra.mxu0 0.0
    %115 = vmatprep.mubr.f32.mxu0 0.0
    %116 = vmatmul.mubr.f32.gmra.mrb[0].mxu0 %v27
    %v117 = vpop.f32.mrb[0].mxu0
    %v118 = vadd.f32 %v49, %v117
    %v119 = vpop.f32.mrb[0].mxu0
    %120 = vdwg.mxu0
    %v121 = vmax.f32 %v118, 0.0
    %v122 = vld [vmem:[%s3] sm:$0xff]
    %v123 = vld [vmem:[%s3 + $0x8] sm:$0xff]
    %v124 = vld [vmem:[%s3 + $0x10] sm:$0xff]
    %v125 = vld [vmem:[%s3 + $0x18] sm:$0xff]
    %v126 = vld [vmem:[%s3 + $0x20] sm:$0xff]
    %v127 = vld [vmem:[%s3 + $0x28] sm:$0xff]
    %v128 = vld [vmem:[%s3 + $0x30] sm:$0xff]
    %v129 = vld [vmem:[%s3 + $0x38] sm:$0xff]
    %v130 = vld [vmem:[%s3 + $0x40] sm:$0xff]
    %v131 = vld [vmem:[%s3 + $0x48] sm:$0xff]
    %v132 = vld [vmem:[%s3 + $0x50] sm:$0xff]
    %v133 = vld [vmem:[%s3 + $0x58] sm:$0xff]
    %v134 = vld [vmem:[%s3 + $0x60] sm:$0xff]
    %v135 = vld [vmem:[%s3 + $0x68] sm:$0xff]
    %v136 = vld [vmem:[%s3 + $0x70] sm:$0xff]
    %v137 = vld [vmem:[%s3 + $0x78] sm:$0xff]
    %v138 = vld [vmem:[%s4] sm:$0x1]
    %v140 = vlaneseq
    %v141 = vshrl.u32 %v140, 7
    %v142 = vsub.s32 0, %v141
    %v143 = vrot.slane %v138, %v142
    %145 = vmatprep.subr.mxu0 0.0
    %146 = vmatpush1.msra.mxu0 %v122
    %147 = vmatprep.subr.mxu0 0.0
    %148 = vmatpush1.msra.mxu0 %v123
    %149 = vmatprep.subr.mxu0 0.0
    %150 = vmatpush1.msra.mxu0 %v124
    %151 = vmatprep.subr.mxu0 0.0
    %152 = vmatpush1.msra.mxu0 %v125
    %153 = vmatprep.subr.mxu0 0.0
    %154 = vmatpush1.msra.mxu0 %v126
    %155 = vmatprep.subr.mxu0 0.0
    %156 = vmatpush1.msra.mxu0 %v127
    %157 = vmatprep.subr.mxu0 0.0
    %158 = vmatpush1.msra.mxu0 %v128
    %159 = vmatprep.subr.mxu0 0.0
    %160 = vmatpush1.msra.mxu0 %v129
    %161 = vmatprep.subr.mxu0 0.0
    %162 = vmatpush1.msra.mxu0 %v130
    %163 = vmatprep.subr.mxu0 0.0
    %164 = vmatpush1.msra.mxu0 %v131
    %165 = vmatprep.subr.mxu0 0.0
    %166 = vmatpush1.msra.mxu0 %v132
    %167 = vmatprep.subr.mxu0 0.0
    %168 = vmatpush1.msra.mxu0 %v133
    %169 = vmatprep.subr.mxu0 0.0
    %170 = vmatpush1.msra.mxu0 %v134
    %171 = vmatprep.subr.mxu0 0.0
    %172 = vmatpush1.msra.mxu0 %v135
    %173 = vmatprep.subr.mxu0 0.0
    %174 = vmatpush1.msra.mxu0 %v136
    %175 = vmatprep.subr.mxu0 0.0
    %176 = vmatpush1.msra.mxu0 %v137
    %177 = vmatprep.subr.mxu0 0.0
    %178 = vmatpush1.msra.mxu0 0.0
    %179 = vmatprep.subr.mxu0 0.0
    %180 = vmatpush1.msra.mxu0 0.0
    %181 = vmatprep.subr.mxu0 0.0
    %182 = vmatpush1.msra.mxu0 0.0
    %183 = vmatprep.subr.mxu0 0.0
    %184 = vmatpush1.msra.mxu0 0.0
    %185 = vmatprep.subr.mxu0 0.0
    %186 = vmatpush1.msra.mxu0 0.0
    %187 = vmatprep.subr.mxu0 0.0
    %188 = vmatpush1.msra.mxu0 0.0
    %189 = vmatprep.subr.mxu0 0.0
    %190 = vmatpush1.msra.mxu0 0.0
    %191 = vmatprep.subr.mxu0 0.0
    %192 = vmatpush1.msra.mxu0 0.0
    %193 = vmatprep.subr.mxu0 0.0
    %194 = vmatpush1.msra.mxu0 0.0
    %195 = vmatprep.subr.mxu0 0.0
    %196 = vmatpush1.msra.mxu0 0.0
    %197 = vmatprep.subr.mxu0 0.0
    %198 = vmatpush1.msra.mxu0 0.0
    %199 = vmatprep.subr.mxu0 0.0
    %200 = vmatpush1.msra.mxu0 0.0
    %201 = vmatprep.subr.mxu0 0.0
    %202 = vmatpush1.msra.mxu0 0.0
    %203 = vmatprep.subr.mxu0 0.0
    %204 = vmatpush1.msra.mxu0 0.0
    %205 = vmatprep.subr.mxu0 0.0
    %206 = vmatpush1.msra.mxu0 0.0
    %207 = vmatprep.subr.mxu0 0.0
    %208 = vmatpush1.msra.mxu0 0.0
    %209 = vmatprep.mubr.f32.mxu0 0.0
    %210 = vmatmul.mubr.f32.gmra.mrb[0].mxu0 %v121
    %v211 = vpop.f32.mrb[0].mxu0
    %v212 = vadd.f32 %v143, %v211
    %v213 = vpop.f32.mrb[0].mxu0
    %214 = vdwg.mxu0
    %v215 = vmax.f32 %v212, 0.0
    %v216 = vld [vmem:[%s5] sm:$0xff]
    %v217 = vld [vmem:[%s5 + $0x8] sm:$0xff]
    %v218 = vld [vmem:[%s5 + $0x10] sm:$0xff]
    %v219 = vld [vmem:[%s5 + $0x18] sm:$0xff]
    %v220 = vld [vmem:[%s5 + $0x20] sm:$0xff]
    %v221 = vld [vmem:[%s5 + $0x28] sm:$0xff]
    %v222 = vld [vmem:[%s5 + $0x30] sm:$0xff]
    %v223 = vld [vmem:[%s5 + $0x38] sm:$0xff]
    %v224 = vld [vmem:[%s6] sm:$0x1]
    %v226 = vlaneseq
    %v227 = vshrl.u32 %v226, 7
    %v228 = vsub.s32 0, %v227
    %v229 = vrot.slane %v224, %v228
    %vm231 = vcmask 523264
    %v233 = vsel %vm231, %v215, 0
    %235 = vmatprep.subr.mxu0 0.0
    %236 = vmatpush1.msra.mxu0 %v216
    %237 = vmatprep.subr.mxu0 0.0
    %238 = vmatpush1.msra.mxu0 %v217
    %239 = vmatprep.subr.mxu0 0.0
    %240 = vmatpush1.msra.mxu0 %v218
    %241 = vmatprep.subr.mxu0 0.0
    %242 = vmatpush1.msra.mxu0 %v219
    %243 = vmatprep.subr.mxu0 0.0
    %244 = vmatpush1.msra.mxu0 %v220
    %245 = vmatprep.subr.mxu0 0.0
    %246 = vmatpush1.msra.mxu0 %v221
    %247 = vmatprep.subr.mxu0 0.0
    %248 = vmatpush1.msra.mxu0 %v222
    %249 = vmatprep.subr.mxu0 0.0
    %250 = vmatpush1.msra.mxu0 %v223
    %251 = vmatprep.subr.mxu0 0.0
    %252 = vmatpush1.msra.mxu0 0.0
    %253 = vmatprep.subr.mxu0 0.0
    %254 = vmatpush1.msra.mxu0 0.0
    %255 = vmatprep.subr.mxu0 0.0
    %256 = vmatpush1.msra.mxu0 0.0
    %257 = vmatprep.subr.mxu0 0.0
    %258 = vmatpush1.msra.mxu0 0.0
    %259 = vmatprep.subr.mxu0 0.0
    %260 = vmatpush1.msra.mxu0 0.0
    %261 = vmatprep.subr.mxu0 0.0
    %262 = vmatpush1.msra.mxu0 0.0
    %263 = vmatprep.subr.mxu0 0.0
    %264 = vmatpush1.msra.mxu0 0.0
    %265 = vmatprep.subr.mxu0 0.0
    %266 = vmatpush1.msra.mxu0 0.0
    %267 = vmatprep.subr.mxu0 0.0
    %268 = vmatpush1.msra.mxu0 0.0
    %269 = vmatprep.subr.mxu0 0.0
    %270 = vmatpush1.msra.mxu0 0.0
    %271 = vmatprep.subr.mxu0 0.0
    %272 = vmatpush1.msra.mxu0 0.0
    %273 = vmatprep.subr.mxu0 0.0
    %274 = vmatpush1.msra.mxu0 0.0
    %275 = vmatprep.subr.mxu0 0.0
    %276 = vmatpush1.msra.mxu0 0.0
    %277 = vmatprep.subr.mxu0 0.0
    %278 = vmatpush1.msra.mxu0 0.0
    %279 = vmatprep.subr.mxu0 0.0
    %280 = vmatpush1.msra.mxu0 0.0
    %281 = vmatprep.subr.mxu0 0.0
    %282 = vmatpush1.msra.mxu0 0.0
    %283 = vmatprep.subr.mxu0 0.0
    %284 = vmatpush1.msra.mxu0 0.0
    %285 = vmatprep.subr.mxu0 0.0
    %286 = vmatpush1.msra.mxu0 0.0
    %287 = vmatprep.subr.mxu0 0.0
    %288 = vmatpush1.msra.mxu0 0.0
    %289 = vmatprep.subr.mxu0 0.0
    %290 = vmatpush1.msra.mxu0 0.0
    %291 = vmatprep.subr.mxu0 0.0
    %292 = vmatpush1.msra.mxu0 0.0
    %293 = vmatprep.subr.mxu0 0.0
    %294 = vmatpush1.msra.mxu0 0.0
    %295 = vmatprep.subr.mxu0 0.0
    %296 = vmatpush1.msra.mxu0 0.0
    %297 = vmatprep.subr.mxu0 0.0
    %298 = vmatpush1.msra.mxu0 0.0
    %299 = vmatprep.mubr.f32.mxu0 0.0
    %300 = vmatmul.mubr.f32.gmra.mrb[0].mxu0 %v233
    %v301 = vpop.f32.mrb[0].mxu0
    %v302 = vadd.f32 %v229, %v301
    %v303 = vpop.f32.mrb[0].mxu0
    %304 = vdwg.mxu0
    %vm305 = vcmask 257024
    %306 = vst.msk [vmem:[#allocation2] sm:$0xf] %vm305, %v302
    // Predicated region
    $region30: #{tpu_custom_call.1} parent=1 // pred_check
      _
    $region31: #{tpu_custom_call.1} parent=1 // pred_check_branch
      %308 = sbr.rel (0) target = $region33
    $region32: #{tpu_custom_call.1} parent=1 // pred_region
      %s310 = ssub.s32 64, 64
      %311 = vsyncadd [#allocation3], %s310
      %s313 = sshll.u32 [#allocation2], 4
      %s314 = int_to_ptr.vmem [resolvable:$true] %s313
      %316 = dma.vmem_to_hbm [thread:$0]  %s314, 64, %s7, [#allocation3]
    $region33: #{tpu_custom_call.1} parent=1 // pred_fallthru
      _
    // Predicated region
    $region34: #{tpu_custom_call.1} parent=1 // pred_check
      _
    $region35: #{tpu_custom_call.1} parent=1 // pred_check_branch
      %318 = sbr.rel (0) target = $region37
    $region36: #{tpu_custom_call.1} parent=1 // pred_region
      %319 = dma.done [#allocation3], 64
    $region37: #{tpu_custom_call.1} parent=1 // pred_fallthru
      _
    %320 = vsyncpa [#allocation3], 1

</llo_original>
